<compile_context>
chip_gen: v7x
topology: tpu7x:2x2x1
jax: 0.10.0
libtpu: 0.0.40
codegen_flags: <defaults>
</compile_context>

<pallas_src>
import jax
import jax.numpy as jnp
from jax.experimental import pallas as pl
from jax.experimental.pallas import tpu as pltpu


def _scale_kernel(w_ref, x_ref, o_ref):
    # w_ref: (tr, 1) per-row scales, already in the output/compute dtype.
    # x_ref / o_ref: (tr, tl) lane-dense tile.  Upcast x to the output dtype
    # (no-op when dtypes already match) and broadcast-multiply.
    o_ref[...] = x_ref[...].astype(o_ref.dtype) * w_ref[...]


def _default_target_block_bytes():
    """Generation-gated per-block byte target (keeps double-buffered footprint
    under each generation's default scoped-VMEM limit)."""
    try:
        kind = jax.devices()[0].device_kind.lower()
    except Exception:
        kind = ""
    if ("v5 lite" in kind) or ("v5e" in kind) or ("v5lite" in kind):
        return 2 * 1024 * 1024   # v5e: 16 MiB default scoped VMEM
    if ("v6" in kind) or ("v7" in kind):
        return 4 * 1024 * 1024   # v6e/v7x: 32 MiB default scoped VMEM
    return 2 * 1024 * 1024       # unknown: conservative


def _choose_tiles(R, L, itemsize, target_block_bytes):
    """Pick (tr, tl) satisfying the (8, 128) block constraint, ~target bytes/block.

    Assumes L % 128 == 0 (misaligned L is routed to the jnp fallback)."""
    # Sublane packing granularity: f32 -> 8, bf16/f16 -> 16.
    sublane = max(8, 32 // itemsize)

    # Prefer a full-row lane tile (one contiguous DMA per block, grid_l == 1)
    # whenever the block budget still fits at least one sublane group of rows,
    # or the whole tensor fits in a single block anyway.
    rows_at_full_L = target_block_bytes // (L * itemsize)
    if rows_at_full_L >= sublane or R * L * itemsize <= target_block_bytes:
        tl = L
    else:
        # Cap tl (multiple of 128) so at least `sublane` rows fit the budget.
        tl_cap = max(128, (target_block_bytes // (sublane * itemsize)) // 128 * 128)
        tl = min(L, tl_cap)

    # Rows per block so one block is ~target_block_bytes.
    rows_budget = max(1, target_block_bytes // (tl * itemsize))
    if rows_budget >= R or R <= sublane:
        tr = R  # whole row axis in one block (block dim == full dim is legal)
    else:
        tr = max(sublane, (rows_budget // sublane) * sublane)  # multiple of 8
    return tr, tl


def scale_module_forward(x, weight, *, donate_input=False, target_block_bytes=None):
    """y = weight * x with weight of shape (1, C, 1, 1) broadcast over NCHW x."""
    N, C, H, W = x.shape
    assert weight.shape == (1, C, 1, 1), "expected per-channel scale (1,C,1,1)"

    # PyTorch type-promotion semantics for torch.mul(weight, x).
    out_dtype = jnp.result_type(weight.dtype, x.dtype)

    R, L = N * C, H * W
    itemsize = jnp.dtype(x.dtype).itemsize

    # Route misaligned / low-precision cases to a plain jnp multiply so XLA
    # fuses it: a standalone Pallas call with masked <128-lane stores (or an
    # in-dtype int8/fp8 multiply) would be both slower and wrong-er.
    supported_dtype = x.dtype in (jnp.float32, jnp.bfloat16, jnp.float16)
    if (L % 128 != 0) or not supported_dtype:
        return weight.astype(out_dtype) * x.astype(out_dtype)

    if target_block_bytes is None:
        target_block_bytes = _default_target_block_bytes()

    # Flatten NCHW -> (N*C, H*W): lane axis is H*W (lane-dense, full `vst`).
    x2 = x.reshape(R, L)
    # Per-row scale column in the promoted dtype.
    w_row = (
        jnp.broadcast_to(weight.reshape(1, C), (N, C)).reshape(R, 1).astype(out_dtype)
    )

    tr, tl = _choose_tiles(R, L, itemsize, target_block_bytes)
    grid = (pl.cdiv(R, tr), pl.cdiv(L, tl))

    # Optionally alias x2 -> output (only legal when dtypes match).
    aliases = {1: 0} if (donate_input and x.dtype == out_dtype) else {}

    y2 = pl.pallas_call(
        _scale_kernel,
        out_shape=jax.ShapeDtypeStruct((R, L), out_dtype),
        grid_spec=pltpu.PrefetchScalarGridSpec(
            num_scalar_prefetch=0,
            grid=grid,
            in_specs=[
                # Per-row scales: same row block as x, single column (== full dim).
                pl.BlockSpec((tr, 1), lambda r, l: (r, 0)),
                # Lane-dense data tile (usually tl == H*W, contiguous DMA).
                pl.BlockSpec((tr, tl), lambda r, l: (r, l)),
            ],
            out_specs=pl.BlockSpec((tr, tl), lambda r, l: (r, l)),
        ),
        input_output_aliases=aliases,
        compiler_params=pltpu.CompilerParams(
            # Both axes independent; row axis first so multi-TC chips can
            # shard row blocks.
            dimension_semantics=("parallel", "parallel"),
        ),
    )(w_row, x2)

    return y2.reshape(N, C, H, W)


if __name__ == "__main__":
    key = jax.random.PRNGKey(0)

    N, C, H, W = 2, 4, 16, 16
    x = jax.random.normal(key, (N, C, H, W), dtype=jnp.float32)

    # Deterministic parameter init, mirroring nn.Parameter(torch.ones(*dims) * init_scale)
    init_scale = 0.73  # non-trivial scale so the check is meaningful
    dims = (1, C, 1, 1)
    weight = jnp.ones(dims, dtype=jnp.float32) * init_scale

    y = scale_module_forward(x, weight)
    y = jax.block_until_ready(y)

    # Reference check (plain JAX broadcast multiply).
    y_ref = weight * x
    assert y.shape == x.shape and y.dtype == y_ref.dtype
    assert jnp.allclose(y, y_ref, atol=1e-6, rtol=1e-6)

    # Also exercise a misaligned spatial size (falls back to the fused jnp path).
    x_small = jax.random.normal(key, (N, C, 7, 7), dtype=jnp.float32)
    y_small = jax.block_until_ready(scale_module_forward(x_small, weight))
    assert jnp.allclose(y_small, weight * x_small, atol=1e-6, rtol=1e-6)

    print("KERNEL_OK")
</pallas_src>

<mosaic_0001>
module attributes {stable_mosaic.version = 11 : i64} {
  func.func @_scale_kernel(%arg0: i32, %arg1: i32, %arg2: memref<8x1xf32, #tpu.memory_space<vmem>>, %arg3: memref<8x256xf32, #tpu.memory_space<vmem>>, %arg4: memref<8x256xf32, #tpu.memory_space<vmem>>) attributes {dimension_semantics = [#tpu.dimension_semantics<parallel>, #tpu.dimension_semantics<parallel>], iteration_bounds = array<i64: 1, 1>, scalar_prefetch = 0 : i64, scratch_operands = 0 : i64, tpu.core_type = #tpu.core_type<tc>, window_params = [{transform_indices = @transform_0, window_bounds = array<i64: 8, 1>}, {transform_indices = @transform_1, window_bounds = array<i64: 8, 256>}, {transform_indices = @transform_2, window_bounds = array<i64: 8, 256>}]} {
    %c0 = arith.constant 0 : index
    %c0_0 = arith.constant 0 : index
    %0 = vector.load %arg3[%c0, %c0_0] : memref<8x256xf32, #tpu.memory_space<vmem>>, vector<8x256xf32>
    %c0_1 = arith.constant 0 : index
    %c0_2 = arith.constant 0 : index
    %1 = vector.load %arg2[%c0_1, %c0_2] : memref<8x1xf32, #tpu.memory_space<vmem>>, vector<8x1xf32>
    %2 = vector.broadcast %1 : vector<8x1xf32> to vector<8x256xf32>
    %3 = arith.mulf %0, %2 : vector<8x256xf32>
    %c0_3 = arith.constant 0 : index
    %c0_4 = arith.constant 0 : index
    %4 = vector.load %arg4[%c0_3, %c0_4] : memref<8x256xf32, #tpu.memory_space<vmem>>, vector<8x256xf32>
    tpu.vector_store %arg4[%c0_3, %c0_4], %3 {strides = array<i32>} : memref<8x256xf32, #tpu.memory_space<vmem>>, vector<8x256xf32>,
    return
  }
  func.func @transform_0(%arg0: i32, %arg1: i32) -> (i32, i32) {
    %c0_i32 = arith.constant 0 : i32
    %c0_i32_0 = arith.constant 0 : i32
    return %arg0, %c0_i32 : i32, i32
  }
  func.func @transform_1(%arg0: i32, %arg1: i32) -> (i32, i32) {
    %c0_i32 = arith.constant 0 : i32
    return %arg0, %arg1 : i32, i32
  }
  func.func @transform_2(%arg0: i32, %arg1: i32) -> (i32, i32) {
    %c0_i32 = arith.constant 0 : i32
    return %arg0, %arg1 : i32, i32
  }
}

</mosaic_0001>

<llo_original>
// kernel: tpu_custom_call.1
$region0: #{tpu_custom_call.1}
  #allocation0 [shape = 'u32[]', space=smem, size = 0x4, offset = 0x4, fixed_abs, tag = 'smem constant byte address 0x4 - core index']
  #allocation1 [shape = 'u32[144,128]{1,0:T(1,128)}', space=vmem, size = 0x12000, scoped, tag = 'internal scratch']
  %s0 = inlined_call_operand.vmem [shape: f32[8,1], index: 0, kind: input, shape index: {}]
  %s1 = inlined_call_operand.hbm [shape: f32[8,256], index: 1, kind: input, shape index: {}]
  %s2 = inlined_call_operand.hbm [shape: f32[8,256], index: 2, kind: output, shape index: {}]
  %s3 = sld [smem:[#allocation0]]
  $region22: #{tpu_custom_call.1} parent=0
    _
  %s5 = ssub.s32 1, %s3
  %s6 = scalar_select 0, %s5, %s3
  $region1: #{tpu_custom_call.1} parent=0
    #allocation2 [shape = 'u8[8192]{0}', space=vmem, size = 0x2000, scoped, tag = 'input window, operand 1, single buffered']
    #allocation3 [shape = 's32[1]{0}', space=sflag, size = 0x4, scoped, tag = 'scoped memory for tpu_custom_call.1']
    #allocation4 [shape = 's32[1]{0}', space=sflag, size = 0x4, scoped, tag = 'scoped memory for tpu_custom_call.1']
    #allocation5 [shape = 'u8[8192]{0}', space=vmem, size = 0x2000, scoped, tag = 'output window, operand 0, single buffered']
    %7 = vsyncpa [#allocation3], 0
    %8 = vsyncpa [#allocation4], 0
    // Predicated region
    $region2: #{tpu_custom_call.1} parent=1 // pred_check
      _
    $region3: #{tpu_custom_call.1} parent=1 // pred_check_branch
      %10 = sbr.rel (0) target = $region5
    $region4: #{tpu_custom_call.1} parent=1 // pred_region
      _
    $region5: #{tpu_custom_call.1} parent=1 // pred_fallthru
      _
    // Predicated region
    $region6: #{tpu_custom_call.1} parent=1 // pred_check
      _
    $region7: #{tpu_custom_call.1} parent=1 // pred_check_branch
      %12 = sbr.rel (0) target = $region9
    $region8: #{tpu_custom_call.1} parent=1 // pred_region
      %s14 = ssub.s32 256, 256
      %15 = vsyncadd [#allocation3], %s14
      %s17 = sshll.u32 [#allocation2], 4
      %s18 = int_to_ptr.vmem [resolvable:$true] %s17
      %20 = dma.hbm_to_vmem [thread:$0]  %s1, 256, %s18, [#allocation3]
    $region9: #{tpu_custom_call.1} parent=1 // pred_fallthru
      _
    // Predicated region
    $region10: #{tpu_custom_call.1} parent=1 // pred_check
      _
    $region11: #{tpu_custom_call.1} parent=1 // pred_check_branch
      %22 = sbr.rel (0) target = $region13
    $region12: #{tpu_custom_call.1} parent=1 // pred_region
      %23 = dma.done [#allocation3], 256
    $region13: #{tpu_custom_call.1} parent=1 // pred_fallthru
      _
    %v24 = vld [vmem:[#allocation2] sm:$0xff]
    %v25 = vld [vmem:[#allocation2 + $0x8] sm:$0xff]
    %v26 = vld [vmem:[%s0] sm:$0xff]
    %28 = vset.pattern.permute.xlu0 0
    %29 = vperm.xlu0 %28, %v26
    %v30 = vpop.permute.xlu0 %29
    %v32 = vmul.f32 %v24, %v30
    %v33 = vmul.f32 %v25, %v30
    %34 = vst [vmem:[#allocation5] sm:$0xff] %v32
    %35 = vst [vmem:[#allocation5 + $0x8] sm:$0xff] %v33
    // Predicated region
    $region14: #{tpu_custom_call.1} parent=1 // pred_check
      _
    $region15: #{tpu_custom_call.1} parent=1 // pred_check_branch
      %37 = sbr.rel (0) target = $region17
    $region16: #{tpu_custom_call.1} parent=1 // pred_region
      %s39 = ssub.s32 256, 256
      %40 = vsyncadd [#allocation4], %s39
      %s42 = sshll.u32 [#allocation5], 4
      %s43 = int_to_ptr.vmem [resolvable:$true] %s42
      %45 = dma.vmem_to_hbm [thread:$0]  %s43, 256, %s2, [#allocation4]
    $region17: #{tpu_custom_call.1} parent=1 // pred_fallthru
      _
    // Predicated region
    $region18: #{tpu_custom_call.1} parent=1 // pred_check
      _
    $region19: #{tpu_custom_call.1} parent=1 // pred_check_branch
      %47 = sbr.rel (0) target = $region21
    $region20: #{tpu_custom_call.1} parent=1 // pred_region
      %48 = dma.done [#allocation4], 256
    $region21: #{tpu_custom_call.1} parent=1 // pred_fallthru
      _
    %49 = vsyncpa [#allocation3], 1
    %50 = vsyncpa [#allocation4], 1

</llo_original>
